<compile_context>
chip_gen: v7x
topology: tpu7x:2x2x1
jax: 0.10.0
libtpu: 0.0.40
codegen_flags: <defaults>
</compile_context>

<pallas_src>
import jax
import jax.numpy as jnp
from jax.experimental import pallas as pl
from jax.experimental.pallas import tpu as pltpu


def lstm_fc_kernel(x_ref, wih_ref, whh_ref, b_ref, fcw_ref, fcb_ref, out_ref):
    B, T, I = x_ref.shape
    H4 = whh_ref.shape[1]
    H = H4 // 4

    # ---- Hoisted input projection: one MXU call for all T time steps. ----
    # (B, T, I) -> (B*T, I) is layout-compatible (no data movement).
    x2d = x_ref[...].reshape(B * T, I)
    xp = (jnp.dot(x2d, wih_ref[...], preferred_element_type=jnp.float32)
          + b_ref[...])                       # (B*T, 4H), biases folded in once
    xp = xp.reshape(B, T, H4)                 # (B, T, 4H), layout-compatible

    whh = whh_ref[...]                        # (H, 4H), resident in vregs

    # Lane mask selecting the g-gate block [2H, 3H) of the 4H gate lanes
    # (PyTorch gate order [i, f, g, o]); lets us run the transcendentals on
    # full 128-lane vregs instead of four 32-lane slices.
    lane = jax.lax.broadcasted_iota(jnp.int32, (B, H4), 1)
    is_g = (lane >= 2 * H) & (lane < 3 * H)

    h = jnp.zeros((B, H), jnp.float32)
    c = jnp.zeros((B, H), jnp.float32)

    # T is static and tiny: fully unrolled recurrence (== fori_loop unroll=True).
    for t in range(T):
        gates = (jnp.dot(h, whh, preferred_element_type=jnp.float32)
                 + xp[:, t, :])                                 # (B, 4H)
        # Full-lane activations, tanh only on the g-gate lanes.
        act = jnp.where(is_g, jnp.tanh(gates), jax.nn.sigmoid(gates))
        i_g = act[:, 0 * H:1 * H]
        f_g = act[:, 1 * H:2 * H]
        g_g = act[:, 2 * H:3 * H]
        o_g = act[:, 3 * H:4 * H]
        c = f_g * c + i_g * g_g
        h = o_g * jnp.tanh(c)

    # ---- Fused final Linear on the last hidden state. ----
    out_ref[...] = (jnp.dot(h, fcw_ref[...], preferred_element_type=jnp.float32)
                    + fcb_ref[...])


def pendulum_rnn_forward(x, params):
    """x: (B, T, I) float32 (batch_first, like PyTorch). Returns (B, O)."""
    B, T, I = x.shape
    H = params["whh"].shape[0]
    O = params["fcw"].shape[1]

    vmem = pl.BlockSpec(memory_space=pltpu.MemorySpace.VMEM)
    return pl.pallas_call(
        lstm_fc_kernel,
        out_shape=jax.ShapeDtypeStruct((B, O), jnp.float32),
        in_specs=[vmem] * 6,       # whole (tiny) operands resident in VMEM
        out_specs=vmem,
    )(x, params["wih"], params["whh"], params["b"], params["fcw"], params["fcb"])


def reference_forward(x, params):
    """Pure-JAX reference of the same LSTM + Linear forward."""
    B, T, I = x.shape
    H = params["whh"].shape[0]

    def step(carry, x_t):
        h, c = carry
        gates = x_t @ params["wih"] + h @ params["whh"] + params["b"]
        i = jax.nn.sigmoid(gates[:, 0 * H:1 * H])
        f = jax.nn.sigmoid(gates[:, 1 * H:2 * H])
        g = jnp.tanh(gates[:, 2 * H:3 * H])
        o = jax.nn.sigmoid(gates[:, 3 * H:4 * H])
        c = f * c + i * g
        h = o * jnp.tanh(c)
        return (h, c), None

    h0 = jnp.zeros((B, H), jnp.float32)
    c0 = jnp.zeros((B, H), jnp.float32)
    (h, _), _ = jax.lax.scan(step, (h0, c0), jnp.transpose(x, (1, 0, 2)))
    return h @ params["fcw"] + params["fcb"]


def init_params(key, input_size, hidden_size, output_size):
    """Deterministic init mimicking PyTorch's U(-1/sqrt(H), 1/sqrt(H))."""
    ks = jax.random.split(key, 6)
    s = 1.0 / jnp.sqrt(hidden_size)
    wih = jax.random.uniform(ks[0], (input_size, 4 * hidden_size),
                             jnp.float32, -s, s)
    whh = jax.random.uniform(ks[1], (hidden_size, 4 * hidden_size),
                             jnp.float32, -s, s)
    b_ih = jax.random.uniform(ks[2], (1, 4 * hidden_size), jnp.float32, -s, s)
    b_hh = jax.random.uniform(ks[3], (1, 4 * hidden_size), jnp.float32, -s, s)
    fcw = jax.random.uniform(ks[4], (hidden_size, output_size),
                             jnp.float32, -s, s)
    fcb = jax.random.uniform(ks[5], (1, output_size), jnp.float32, -s, s)
    return {"wih": wih, "whh": whh, "b": b_ih + b_hh, "fcw": fcw, "fcb": fcb}


if __name__ == "__main__":
    # Small shapes consistent with the module's forward:
    # batch=2, seq=8, input_size=4, hidden_size=32, output_size=2
    B, T, I, H, O = 2, 8, 4, 32, 2

    key = jax.random.PRNGKey(0)
    kx, kp = jax.random.split(key)
    x = jax.random.normal(kx, (B, T, I), jnp.float32)
    params = init_params(kp, I, H, O)

    y = pendulum_rnn_forward(x, params)
    y = jax.block_until_ready(y)

    y_ref = reference_forward(x, params)
    assert y.shape == (B, O)
    assert jnp.allclose(y, y_ref, atol=1e-5, rtol=1e-5), (y, y_ref)

    print("KERNEL_OK")
</pallas_src>

<mosaic_0001>
module attributes {stable_mosaic.version = 11 : i64} {
  func.func @lstm_fc_kernel(%arg0: memref<2x8x4xf32, #tpu.memory_space<vmem>>, %arg1: memref<4x128xf32, #tpu.memory_space<vmem>>, %arg2: memref<32x128xf32, #tpu.memory_space<vmem>>, %arg3: memref<1x128xf32, #tpu.memory_space<vmem>>, %arg4: memref<32x2xf32, #tpu.memory_space<vmem>>, %arg5: memref<1x2xf32, #tpu.memory_space<vmem>>, %arg6: memref<2x2xf32, #tpu.memory_space<vmem>>) attributes {dimension_semantics = [], scalar_prefetch = 0 : i64, scratch_operands = 0 : i64, tpu.core_type = #tpu.core_type<tc>} {
    %c0 = arith.constant 0 : index
    %c0_0 = arith.constant 0 : index
    %c0_1 = arith.constant 0 : index
    %0 = vector.load %arg0[%c0, %c0_0, %c0_1] : memref<2x8x4xf32, #tpu.memory_space<vmem>>, vector<2x8x4xf32>
    %1 = vector.shape_cast %0 : vector<2x8x4xf32> to vector<16x4xf32>
    %c0_2 = arith.constant 0 : index
    %c0_3 = arith.constant 0 : index
    %2 = vector.load %arg1[%c0_2, %c0_3] : memref<4x128xf32, #tpu.memory_space<vmem>>, vector<4x128xf32>
    %cst = arith.constant dense<0.000000e+00> : vector<16x128xf32>
    %3 = tpu.matmul %1, %2, %cst {dimension_numbers = #tpu.dot_dimension_numbers<[1], [0], [0], [1], [0, 0, 1, 1], [], []>} : vector<16x4xf32>, vector<4x128xf32>, vector<16x128xf32> -> vector<16x128xf32>
    %c0_4 = arith.constant 0 : index
    %c0_5 = arith.constant 0 : index
    %4 = vector.load %arg3[%c0_4, %c0_5] : memref<1x128xf32, #tpu.memory_space<vmem>>, vector<1x128xf32>
    %5 = vector.broadcast %4 : vector<1x128xf32> to vector<16x128xf32>
    %6 = arith.addf %3, %5 : vector<16x128xf32>
    %7 = vector.shape_cast %6 : vector<16x128xf32> to vector<2x8x128xf32>
    %c0_6 = arith.constant 0 : index
    %c0_7 = arith.constant 0 : index
    %8 = vector.load %arg2[%c0_6, %c0_7] : memref<32x128xf32, #tpu.memory_space<vmem>>, vector<32x128xf32>
    %9 = tpu.iota {dimensions = array<i32: 1>} : vector<2x128xi32>
    %c64_i32 = arith.constant 64 : i32
    %10 = vector.broadcast %c64_i32 : i32 to vector<2x128xi32>
    %11 = arith.cmpi sge, %9, %10 : vector<2x128xi32>
    %c96_i32 = arith.constant 96 : i32
    %12 = vector.broadcast %c96_i32 : i32 to vector<2x128xi32>
    %13 = arith.cmpi slt, %9, %12 : vector<2x128xi32>
    %14 = arith.andi %11, %13 : vector<2x128xi1>
    %cst_8 = arith.constant 0.000000e+00 : f32
    %15 = vector.broadcast %cst_8 : f32 to vector<2x32xf32>
    %cst_9 = arith.constant 0.000000e+00 : f32
    %16 = vector.broadcast %cst_9 : f32 to vector<2x32xf32>
    %cst_10 = arith.constant dense<0.000000e+00> : vector<2x128xf32>
    %17 = tpu.matmul %15, %8, %cst_10 {dimension_numbers = #tpu.dot_dimension_numbers<[1], [0], [0], [1], [0, 0, 1, 1], [], []>} : vector<2x32xf32>, vector<32x128xf32>, vector<2x128xf32> -> vector<2x128xf32>
    %18 = vector.extract_strided_slice %7 {offsets = [0, 0, 0], sizes = [2, 1, 128], strides = [1, 1, 1]} : vector<2x8x128xf32> to vector<2x1x128xf32>
    %19 = vector.shape_cast %18 : vector<2x1x128xf32> to vector<2x128xf32>
    %20 = arith.addf %17, %19 : vector<2x128xf32>
    %21 = math.tanh %20 : vector<2x128xf32>
    %22 = arith.negf %20 : vector<2x128xf32>
    %23 = math.exp %22 : vector<2x128xf32>
    %cst_11 = arith.constant 1.000000e+00 : f32
    %24 = vector.broadcast %cst_11 : f32 to vector<2x128xf32>
    %25 = arith.addf %24, %23 : vector<2x128xf32>
    %26 = arith.divf %24, %25 : vector<2x128xf32>
    %27 = arith.select %14, %21, %26 : vector<2x128xi1>, vector<2x128xf32>
    %28 = vector.extract_strided_slice %27 {offsets = [0, 0], sizes = [2, 32], strides = [1, 1]} : vector<2x128xf32> to vector<2x32xf32>
    %29 = vector.extract_strided_slice %27 {offsets = [0, 32], sizes = [2, 32], strides = [1, 1]} : vector<2x128xf32> to vector<2x32xf32>
    %30 = vector.extract_strided_slice %27 {offsets = [0, 64], sizes = [2, 32], strides = [1, 1]} : vector<2x128xf32> to vector<2x32xf32>
    %31 = vector.extract_strided_slice %27 {offsets = [0, 96], sizes = [2, 32], strides = [1, 1]} : vector<2x128xf32> to vector<2x32xf32>
    %32 = arith.mulf %29, %16 : vector<2x32xf32>
    %33 = arith.mulf %28, %30 : vector<2x32xf32>
    %34 = arith.addf %32, %33 : vector<2x32xf32>
    %35 = math.tanh %34 : vector<2x32xf32>
    %36 = arith.mulf %31, %35 : vector<2x32xf32>
    %cst_12 = arith.constant dense<0.000000e+00> : vector<2x128xf32>
    %37 = tpu.matmul %36, %8, %cst_12 {dimension_numbers = #tpu.dot_dimension_numbers<[1], [0], [0], [1], [0, 0, 1, 1], [], []>} : vector<2x32xf32>, vector<32x128xf32>, vector<2x128xf32> -> vector<2x128xf32>
    %38 = vector.extract_strided_slice %7 {offsets = [0, 1, 0], sizes = [2, 1, 128], strides = [1, 1, 1]} : vector<2x8x128xf32> to vector<2x1x128xf32>
    %39 = vector.shape_cast %38 : vector<2x1x128xf32> to vector<2x128xf32>
    %40 = arith.addf %37, %39 : vector<2x128xf32>
    %41 = math.tanh %40 : vector<2x128xf32>
    %42 = arith.negf %40 : vector<2x128xf32>
    %43 = math.exp %42 : vector<2x128xf32>
    %cst_13 = arith.constant 1.000000e+00 : f32
    %44 = vector.broadcast %cst_13 : f32 to vector<2x128xf32>
    %45 = arith.addf %44, %43 : vector<2x128xf32>
    %46 = arith.divf %44, %45 : vector<2x128xf32>
    %47 = arith.select %14, %41, %46 : vector<2x128xi1>, vector<2x128xf32>
    %48 = vector.extract_strided_slice %47 {offsets = [0, 0], sizes = [2, 32], strides = [1, 1]} : vector<2x128xf32> to vector<2x32xf32>
    %49 = vector.extract_strided_slice %47 {offsets = [0, 32], sizes = [2, 32], strides = [1, 1]} : vector<2x128xf32> to vector<2x32xf32>
    %50 = vector.extract_strided_slice %47 {offsets = [0, 64], sizes = [2, 32], strides = [1, 1]} : vector<2x128xf32> to vector<2x32xf32>
    %51 = vector.extract_strided_slice %47 {offsets = [0, 96], sizes = [2, 32], strides = [1, 1]} : vector<2x128xf32> to vector<2x32xf32>
    %52 = arith.mulf %49, %34 : vector<2x32xf32>
    %53 = arith.mulf %48, %50 : vector<2x32xf32>
    %54 = arith.addf %52, %53 : vector<2x32xf32>
    %55 = math.tanh %54 : vector<2x32xf32>
    %56 = arith.mulf %51, %55 : vector<2x32xf32>
    %cst_14 = arith.constant dense<0.000000e+00> : vector<2x128xf32>
    %57 = tpu.matmul %56, %8, %cst_14 {dimension_numbers = #tpu.dot_dimension_numbers<[1], [0], [0], [1], [0, 0, 1, 1], [], []>} : vector<2x32xf32>, vector<32x128xf32>, vector<2x128xf32> -> vector<2x128xf32>
    %58 = vector.extract_strided_slice %7 {offsets = [0, 2, 0], sizes = [2, 1, 128], strides = [1, 1, 1]} : vector<2x8x128xf32> to vector<2x1x128xf32>
    %59 = vector.shape_cast %58 : vector<2x1x128xf32> to vector<2x128xf32>
    %60 = arith.addf %57, %59 : vector<2x128xf32>
    %61 = math.tanh %60 : vector<2x128xf32>
    %62 = arith.negf %60 : vector<2x128xf32>
    %63 = math.exp %62 : vector<2x128xf32>
    %cst_15 = arith.constant 1.000000e+00 : f32
    %64 = vector.broadcast %cst_15 : f32 to vector<2x128xf32>
    %65 = arith.addf %64, %63 : vector<2x128xf32>
    %66 = arith.divf %64, %65 : vector<2x128xf32>
    %67 = arith.select %14, %61, %66 : vector<2x128xi1>, vector<2x128xf32>
    %68 = vector.extract_strided_slice %67 {offsets = [0, 0], sizes = [2, 32], strides = [1, 1]} : vector<2x128xf32> to vector<2x32xf32>
    %69 = vector.extract_strided_slice %67 {offsets = [0, 32], sizes = [2, 32], strides = [1, 1]} : vector<2x128xf32> to vector<2x32xf32>
    %70 = vector.extract_strided_slice %67 {offsets = [0, 64], sizes = [2, 32], strides = [1, 1]} : vector<2x128xf32> to vector<2x32xf32>
    %71 = vector.extract_strided_slice %67 {offsets = [0, 96], sizes = [2, 32], strides = [1, 1]} : vector<2x128xf32> to vector<2x32xf32>
    %72 = arith.mulf %69, %54 : vector<2x32xf32>
    %73 = arith.mulf %68, %70 : vector<2x32xf32>
    %74 = arith.addf %72, %73 : vector<2x32xf32>
    %75 = math.tanh %74 : vector<2x32xf32>
    %76 = arith.mulf %71, %75 : vector<2x32xf32>
    %cst_16 = arith.constant dense<0.000000e+00> : vector<2x128xf32>
    %77 = tpu.matmul %76, %8, %cst_16 {dimension_numbers = #tpu.dot_dimension_numbers<[1], [0], [0], [1], [0, 0, 1, 1], [], []>} : vector<2x32xf32>, vector<32x128xf32>, vector<2x128xf32> -> vector<2x128xf32>
    %78 = vector.extract_strided_slice %7 {offsets = [0, 3, 0], sizes = [2, 1, 128], strides = [1, 1, 1]} : vector<2x8x128xf32> to vector<2x1x128xf32>
    %79 = vector.shape_cast %78 : vector<2x1x128xf32> to vector<2x128xf32>
    %80 = arith.addf %77, %79 : vector<2x128xf32>
    %81 = math.tanh %80 : vector<2x128xf32>
    %82 = arith.negf %80 : vector<2x128xf32>
    %83 = math.exp %82 : vector<2x128xf32>
    %cst_17 = arith.constant 1.000000e+00 : f32
    %84 = vector.broadcast %cst_17 : f32 to vector<2x128xf32>
    %85 = arith.addf %84, %83 : vector<2x128xf32>
    %86 = arith.divf %84, %85 : vector<2x128xf32>
    %87 = arith.select %14, %81, %86 : vector<2x128xi1>, vector<2x128xf32>
    %88 = vector.extract_strided_slice %87 {offsets = [0, 0], sizes = [2, 32], strides = [1, 1]} : vector<2x128xf32> to vector<2x32xf32>
    %89 = vector.extract_strided_slice %87 {offsets = [0, 32], sizes = [2, 32], strides = [1, 1]} : vector<2x128xf32> to vector<2x32xf32>
    %90 = vector.extract_strided_slice %87 {offsets = [0, 64], sizes = [2, 32], strides = [1, 1]} : vector<2x128xf32> to vector<2x32xf32>
    %91 = vector.extract_strided_slice %87 {offsets = [0, 96], sizes = [2, 32], strides = [1, 1]} : vector<2x128xf32> to vector<2x32xf32>
    %92 = arith.mulf %89, %74 : vector<2x32xf32>
    %93 = arith.mulf %88, %90 : vector<2x32xf32>
    %94 = arith.addf %92, %93 : vector<2x32xf32>
    %95 = math.tanh %94 : vector<2x32xf32>
    %96 = arith.mulf %91, %95 : vector<2x32xf32>
    %cst_18 = arith.constant dense<0.000000e+00> : vector<2x128xf32>
    %97 = tpu.matmul %96, %8, %cst_18 {dimension_numbers = #tpu.dot_dimension_numbers<[1], [0], [0], [1], [0, 0, 1, 1], [], []>} : vector<2x32xf32>, vector<32x128xf32>, vector<2x128xf32> -> vector<2x128xf32>
    %98 = vector.extract_strided_slice %7 {offsets = [0, 4, 0], sizes = [2, 1, 128], strides = [1, 1, 1]} : vector<2x8x128xf32> to vector<2x1x128xf32>
    %99 = vector.shape_cast %98 : vector<2x1x128xf32> to vector<2x128xf32>
    %100 = arith.addf %97, %99 : vector<2x128xf32>
    %101 = math.tanh %100 : vector<2x128xf32>
    %102 = arith.negf %100 : vector<2x128xf32>
    %103 = math.exp %102 : vector<2x128xf32>
    %cst_19 = arith.constant 1.000000e+00 : f32
    %104 = vector.broadcast %cst_19 : f32 to vector<2x128xf32>
    %105 = arith.addf %104, %103 : vector<2x128xf32>
    %106 = arith.divf %104, %105 : vector<2x128xf32>
    %107 = arith.select %14, %101, %106 : vector<2x128xi1>, vector<2x128xf32>
    %108 = vector.extract_strided_slice %107 {offsets = [0, 0], sizes = [2, 32], strides = [1, 1]} : vector<2x128xf32> to vector<2x32xf32>
    %109 = vector.extract_strided_slice %107 {offsets = [0, 32], sizes = [2, 32], strides = [1, 1]} : vector<2x128xf32> to vector<2x32xf32>
    %110 = vector.extract_strided_slice %107 {offsets = [0, 64], sizes = [2, 32], strides = [1, 1]} : vector<2x128xf32> to vector<2x32xf32>
    %111 = vector.extract_strided_slice %107 {offsets = [0, 96], sizes = [2, 32], strides = [1, 1]} : vector<2x128xf32> to vector<2x32xf32>
    %112 = arith.mulf %109, %94 : vector<2x32xf32>
    %113 = arith.mulf %108, %110 : vector<2x32xf32>
    %114 = arith.addf %112, %113 : vector<2x32xf32>
    %115 = math.tanh %114 : vector<2x32xf32>
    %116 = arith.mulf %111, %115 : vector<2x32xf32>
    %cst_20 = arith.constant dense<0.000000e+00> : vector<2x128xf32>
    %117 = tpu.matmul %116, %8, %cst_20 {dimension_numbers = #tpu.dot_dimension_numbers<[1], [0], [0], [1], [0, 0, 1, 1], [], []>} : vector<2x32xf32>, vector<32x128xf32>, vector<2x128xf32> -> vector<2x128xf32>
    %118 = vector.extract_strided_slice %7 {offsets = [0, 5, 0], sizes = [2, 1, 128], strides = [1, 1, 1]} : vector<2x8x128xf32> to vector<2x1x128xf32>
    %119 = vector.shape_cast %118 : vector<2x1x128xf32> to vector<2x128xf32>
    %120 = arith.addf %117, %119 : vector<2x128xf32>
    %121 = math.tanh %120 : vector<2x128xf32>
    %122 = arith.negf %120 : vector<2x128xf32>
    %123 = math.exp %122 : vector<2x128xf32>
    %cst_21 = arith.constant 1.000000e+00 : f32
    %124 = vector.broadcast %cst_21 : f32 to vector<2x128xf32>
    %125 = arith.addf %124, %123 : vector<2x128xf32>
    %126 = arith.divf %124, %125 : vector<2x128xf32>
    %127 = arith.select %14, %121, %126 : vector<2x128xi1>, vector<2x128xf32>
    %128 = vector.extract_strided_slice %127 {offsets = [0, 0], sizes = [2, 32], strides = [1, 1]} : vector<2x128xf32> to vector<2x32xf32>
    %129 = vector.extract_strided_slice %127 {offsets = [0, 32], sizes = [2, 32], strides = [1, 1]} : vector<2x128xf32> to vector<2x32xf32>
    %130 = vector.extract_strided_slice %127 {offsets = [0, 64], sizes = [2, 32], strides = [1, 1]} : vector<2x128xf32> to vector<2x32xf32>
    %131 = vector.extract_strided_slice %127 {offsets = [0, 96], sizes = [2, 32], strides = [1, 1]} : vector<2x128xf32> to vector<2x32xf32>
    %132 = arith.mulf %129, %114 : vector<2x32xf32>
    %133 = arith.mulf %128, %130 : vector<2x32xf32>
    %134 = arith.addf %132, %133 : vector<2x32xf32>
    %135 = math.tanh %134 : vector<2x32xf32>
    %136 = arith.mulf %131, %135 : vector<2x32xf32>
    %cst_22 = arith.constant dense<0.000000e+00> : vector<2x128xf32>
    %137 = tpu.matmul %136, %8, %cst_22 {dimension_numbers = #tpu.dot_dimension_numbers<[1], [0], [0], [1], [0, 0, 1, 1], [], []>} : vector<2x32xf32>, vector<32x128xf32>, vector<2x128xf32> -> vector<2x128xf32>
    %138 = vector.extract_strided_slice %7 {offsets = [0, 6, 0], sizes = [2, 1, 128], strides = [1, 1, 1]} : vector<2x8x128xf32> to vector<2x1x128xf32>
    %139 = vector.shape_cast %138 : vector<2x1x128xf32> to vector<2x128xf32>
    %140 = arith.addf %137, %139 : vector<2x128xf32>
    %141 = math.tanh %140 : vector<2x128xf32>
    %142 = arith.negf %140 : vector<2x128xf32>
    %143 = math.exp %142 : vector<2x128xf32>
    %cst_23 = arith.constant 1.000000e+00 : f32
    %144 = vector.broadcast %cst_23 : f32 to vector<2x128xf32>
    %145 = arith.addf %144, %143 : vector<2x128xf32>
    %146 = arith.divf %144, %145 : vector<2x128xf32>
    %147 = arith.select %14, %141, %146 : vector<2x128xi1>, vector<2x128xf32>
    %148 = vector.extract_strided_slice %147 {offsets = [0, 0], sizes = [2, 32], strides = [1, 1]} : vector<2x128xf32> to vector<2x32xf32>
    %149 = vector.extract_strided_slice %147 {offsets = [0, 32], sizes = [2, 32], strides = [1, 1]} : vector<2x128xf32> to vector<2x32xf32>
    %150 = vector.extract_strided_slice %147 {offsets = [0, 64], sizes = [2, 32], strides = [1, 1]} : vector<2x128xf32> to vector<2x32xf32>
    %151 = vector.extract_strided_slice %147 {offsets = [0, 96], sizes = [2, 32], strides = [1, 1]} : vector<2x128xf32> to vector<2x32xf32>
    %152 = arith.mulf %149, %134 : vector<2x32xf32>
    %153 = arith.mulf %148, %150 : vector<2x32xf32>
    %154 = arith.addf %152, %153 : vector<2x32xf32>
    %155 = math.tanh %154 : vector<2x32xf32>
    %156 = arith.mulf %151, %155 : vector<2x32xf32>
    %cst_24 = arith.constant dense<0.000000e+00> : vector<2x128xf32>
    %157 = tpu.matmul %156, %8, %cst_24 {dimension_numbers = #tpu.dot_dimension_numbers<[1], [0], [0], [1], [0, 0, 1, 1], [], []>} : vector<2x32xf32>, vector<32x128xf32>, vector<2x128xf32> -> vector<2x128xf32>
    %158 = vector.extract_strided_slice %7 {offsets = [0, 7, 0], sizes = [2, 1, 128], strides = [1, 1, 1]} : vector<2x8x128xf32> to vector<2x1x128xf32>
    %159 = vector.shape_cast %158 : vector<2x1x128xf32> to vector<2x128xf32>
    %160 = arith.addf %157, %159 : vector<2x128xf32>
    %161 = math.tanh %160 : vector<2x128xf32>
    %162 = arith.negf %160 : vector<2x128xf32>
    %163 = math.exp %162 : vector<2x128xf32>
    %cst_25 = arith.constant 1.000000e+00 : f32
    %164 = vector.broadcast %cst_25 : f32 to vector<2x128xf32>
    %165 = arith.addf %164, %163 : vector<2x128xf32>
    %166 = arith.divf %164, %165 : vector<2x128xf32>
    %167 = arith.select %14, %161, %166 : vector<2x128xi1>, vector<2x128xf32>
    %168 = vector.extract_strided_slice %167 {offsets = [0, 0], sizes = [2, 32], strides = [1, 1]} : vector<2x128xf32> to vector<2x32xf32>
    %169 = vector.extract_strided_slice %167 {offsets = [0, 32], sizes = [2, 32], strides = [1, 1]} : vector<2x128xf32> to vector<2x32xf32>
    %170 = vector.extract_strided_slice %167 {offsets = [0, 64], sizes = [2, 32], strides = [1, 1]} : vector<2x128xf32> to vector<2x32xf32>
    %171 = vector.extract_strided_slice %167 {offsets = [0, 96], sizes = [2, 32], strides = [1, 1]} : vector<2x128xf32> to vector<2x32xf32>
    %172 = arith.mulf %169, %154 : vector<2x32xf32>
    %173 = arith.mulf %168, %170 : vector<2x32xf32>
    %174 = arith.addf %172, %173 : vector<2x32xf32>
    %175 = math.tanh %174 : vector<2x32xf32>
    %176 = arith.mulf %171, %175 : vector<2x32xf32>
    %c0_26 = arith.constant 0 : index
    %c0_27 = arith.constant 0 : index
    %177 = vector.load %arg4[%c0_26, %c0_27] : memref<32x2xf32, #tpu.memory_space<vmem>>, vector<32x2xf32>
    %cst_28 = arith.constant dense<0.000000e+00> : vector<2x2xf32>
    %178 = tpu.matmul %176, %177, %cst_28 {dimension_numbers = #tpu.dot_dimension_numbers<[1], [0], [0], [1], [0, 0, 1, 1], [], []>} : vector<2x32xf32>, vector<32x2xf32>, vector<2x2xf32> -> vector<2x2xf32>
    %c0_29 = arith.constant 0 : index
    %c0_30 = arith.constant 0 : index
    %179 = vector.load %arg5[%c0_29, %c0_30] : memref<1x2xf32, #tpu.memory_space<vmem>>, vector<1x2xf32>
    %180 = vector.broadcast %179 : vector<1x2xf32> to vector<2x2xf32>
    %181 = arith.addf %178, %180 : vector<2x2xf32>
    %c0_31 = arith.constant 0 : index
    %c0_32 = arith.constant 0 : index
    %182 = vector.load %arg6[%c0_31, %c0_32] : memref<2x2xf32, #tpu.memory_space<vmem>>, vector<2x2xf32>
    tpu.vector_store %arg6[%c0_31, %c0_32], %181 {strides = array<i32>} : memref<2x2xf32, #tpu.memory_space<vmem>>, vector<2x2xf32>,
    return
  }
}

</mosaic_0001>

<llo_original>
// kernel: tpu_custom_call.1
$region0: #{tpu_custom_call.1}
  #allocation0 [shape = 'u32[]', space=smem, size = 0x4, offset = 0x4, fixed_abs, tag = 'smem constant byte address 0x4 - core index']
  #allocation1 [shape = 'u32[144,128]{1,0:T(1,128)}', space=vmem, size = 0x12000, scoped, tag = 'internal scratch']
  %s0 = inlined_call_operand.vmem [shape: f32[2,8,4], index: 0, kind: input, shape index: {}]
  %s1 = inlined_call_operand.vmem [shape: f32[4,128], index: 1, kind: input, shape index: {}]
  %s2 = inlined_call_operand.vmem [shape: f32[32,128], index: 2, kind: input, shape index: {}]
  %s3 = inlined_call_operand.vmem [shape: f32[1,128], index: 3, kind: input, shape index: {}]
  %s4 = inlined_call_operand.vmem [shape: f32[32,2], index: 4, kind: input, shape index: {}]
  %s5 = inlined_call_operand.vmem [shape: f32[1,2], index: 5, kind: input, shape index: {}]
  %s6 = inlined_call_operand.hbm [shape: f32[2,2], index: 6, kind: output, shape index: {}]
  %s7 = sld [smem:[#allocation0]]
  $region34: #{tpu_custom_call.1} parent=0
    _
  %s9 = ssub.s32 1, %s7
  %s10 = scalar_select 0, %s9, %s7
  $region1: #{tpu_custom_call.1} parent=0
    #allocation2 [shape = 'u8[1024]{0}', space=vmem, size = 0x400, scoped, tag = 'output window, operand 0, single buffered']
    #allocation3 [shape = 's32[1]{0}', space=sflag, size = 0x4, scoped, tag = 'scoped memory for tpu_custom_call.1']
    %11 = vsyncpa [#allocation3], 0
    // Predicated region
    $region2: #{tpu_custom_call.1} parent=1 // pred_check
      _
    $region3: #{tpu_custom_call.1} parent=1 // pred_check_branch
      %13 = sbr.rel (0) target = $region5
    $region4: #{tpu_custom_call.1} parent=1 // pred_region
      _
    $region5: #{tpu_custom_call.1} parent=1 // pred_fallthru
      _
    // Predicated region
    $region6: #{tpu_custom_call.1} parent=1 // pred_check
      _
    $region7: #{tpu_custom_call.1} parent=1 // pred_check_branch
      %15 = sbr.rel (0) target = $region9
    $region8: #{tpu_custom_call.1} parent=1 // pred_region
      _
    $region9: #{tpu_custom_call.1} parent=1 // pred_fallthru
      _
    // Predicated region
    $region10: #{tpu_custom_call.1} parent=1 // pred_check
      _
    $region11: #{tpu_custom_call.1} parent=1 // pred_check_branch
      %17 = sbr.rel (0) target = $region13
    $region12: #{tpu_custom_call.1} parent=1 // pred_region
      _
    $region13: #{tpu_custom_call.1} parent=1 // pred_fallthru
      _
    // Predicated region
    $region14: #{tpu_custom_call.1} parent=1 // pred_check
      _
    $region15: #{tpu_custom_call.1} parent=1 // pred_check_branch
      %19 = sbr.rel (0) target = $region17
    $region16: #{tpu_custom_call.1} parent=1 // pred_region
      _
    $region17: #{tpu_custom_call.1} parent=1 // pred_fallthru
      _
    // Predicated region
    $region18: #{tpu_custom_call.1} parent=1 // pred_check
      _
    $region19: #{tpu_custom_call.1} parent=1 // pred_check_branch
      %21 = sbr.rel (0) target = $region21
    $region20: #{tpu_custom_call.1} parent=1 // pred_region
      _
    $region21: #{tpu_custom_call.1} parent=1 // pred_fallthru
      _
    // Predicated region
    $region22: #{tpu_custom_call.1} parent=1 // pred_check
      _
    $region23: #{tpu_custom_call.1} parent=1 // pred_check_branch
      %23 = sbr.rel (0) target = $region25
    $region24: #{tpu_custom_call.1} parent=1 // pred_region
      _
    $region25: #{tpu_custom_call.1} parent=1 // pred_fallthru
      _
    %v24 = vld [vmem:[%s0] sm:$0xff]
    %v25 = vld [vmem:[%s0 + $0x8] sm:$0xff]
    %v26 = vld [vmem:[%s1] sm:$0xf]
    %v27 = vld [vmem:[%s3] sm:$0x1]
    %v29 = vlaneseq
    %v30 = vshrl.u32 %v29, 7
    %v31 = vsub.s32 0, %v30
    %v32 = vrot.slane %v27, %v31
    %vm34 = vcmask 31744
    %v36 = vsel %vm34, %v24, 0
    %v39 = vsel %vm34, %v25, 0
    %vm41 = vcmask 1043456
    %v43 = vsel %vm41, %v26, 0
    %45 = vmatprep.subr.mxu0 0.0
    %46 = vmatpush1.msra.mxu0 %v43
    %47 = vmatprep.subr.mxu0 0.0
    %48 = vmatpush1.msra.mxu0 0.0
    %49 = vmatprep.subr.mxu0 0.0
    %50 = vmatpush1.msra.mxu0 0.0
    %51 = vmatprep.subr.mxu0 0.0
    %52 = vmatpush1.msra.mxu0 0.0
    %53 = vmatprep.subr.mxu0 0.0
    %54 = vmatpush1.msra.mxu0 0.0
    %55 = vmatprep.subr.mxu0 0.0
    %56 = vmatpush1.msra.mxu0 0.0
    %57 = vmatprep.subr.mxu0 0.0
    %58 = vmatpush1.msra.mxu0 0.0
    %59 = vmatprep.subr.mxu0 0.0
    %60 = vmatpush1.msra.mxu0 0.0
    %61 = vmatprep.subr.mxu0 0.0
    %62 = vmatpush1.msra.mxu0 0.0
    %63 = vmatprep.subr.mxu0 0.0
    %64 = vmatpush1.msra.mxu0 0.0
    %65 = vmatprep.subr.mxu0 0.0
    %66 = vmatpush1.msra.mxu0 0.0
    %67 = vmatprep.subr.mxu0 0.0
    %68 = vmatpush1.msra.mxu0 0.0
    %69 = vmatprep.subr.mxu0 0.0
    %70 = vmatpush1.msra.mxu0 0.0
    %71 = vmatprep.subr.mxu0 0.0
    %72 = vmatpush1.msra.mxu0 0.0
    %73 = vmatprep.subr.mxu0 0.0
    %74 = vmatpush1.msra.mxu0 0.0
    %75 = vmatprep.subr.mxu0 0.0
    %76 = vmatpush1.msra.mxu0 0.0
    %77 = vmatprep.subr.mxu0 0.0
    %78 = vmatpush1.msra.mxu0 0.0
    %79 = vmatprep.subr.mxu0 0.0
    %80 = vmatpush1.msra.mxu0 0.0
    %81 = vmatprep.subr.mxu0 0.0
    %82 = vmatpush1.msra.mxu0 0.0
    %83 = vmatprep.subr.mxu0 0.0
    %84 = vmatpush1.msra.mxu0 0.0
    %85 = vmatprep.subr.mxu0 0.0
    %86 = vmatpush1.msra.mxu0 0.0
    %87 = vmatprep.subr.mxu0 0.0
    %88 = vmatpush1.msra.mxu0 0.0
    %89 = vmatprep.subr.mxu0 0.0
    %90 = vmatpush1.msra.mxu0 0.0
    %91 = vmatprep.subr.mxu0 0.0
    %92 = vmatpush1.msra.mxu0 0.0
    %93 = vmatprep.subr.mxu0 0.0
    %94 = vmatpush1.msra.mxu0 0.0
    %95 = vmatprep.subr.mxu0 0.0
    %96 = vmatpush1.msra.mxu0 0.0
    %97 = vmatprep.subr.mxu0 0.0
    %98 = vmatpush1.msra.mxu0 0.0
    %99 = vmatprep.subr.mxu0 0.0
    %100 = vmatpush1.msra.mxu0 0.0
    %101 = vmatprep.subr.mxu0 0.0
    %102 = vmatpush1.msra.mxu0 0.0
    %103 = vmatprep.subr.mxu0 0.0
    %104 = vmatpush1.msra.mxu0 0.0
    %105 = vmatprep.subr.mxu0 0.0
    %106 = vmatpush1.msra.mxu0 0.0
    %107 = vmatprep.subr.mxu0 0.0
    %108 = vmatpush1.msra.mxu0 0.0
    %109 = vmatprep.mubr.f32.mxu0 0.0
    %110 = vmatmul.mubr.f32.gmra.mrb[0].mxu0 %v36
    %v111 = vpop.f32.mrb[0].mxu0
    %v112 = vadd.f32 %v32, %v111
    %v113 = vpop.f32.mrb[0].mxu0
    %114 = vmatprep.mubr.f32.mxu0 0.0
    %115 = vmatmul.mubr.f32.gmra.mrb[0].mxu0 %v39
    %v116 = vpop.f32.mrb[0].mxu0
    %v117 = vadd.f32 %v32, %v116
    %v118 = vpop.f32.mrb[0].mxu0
    %119 = vdwg.mxu0
    %v120 = vld [vmem:[%s2] sm:$0xff]
    %v121 = vld [vmem:[%s2 + $0x8] sm:$0xff]
    %v122 = vld [vmem:[%s2 + $0x10] sm:$0xff]
    %v123 = vld [vmem:[%s2 + $0x18] sm:$0xff]
    %v124 = vlaneseq
    %v125 = vand.u32 %v124, 127
    %vm126 = vcmp.ge.s32.totalorder %v125, 64
    %vm127 = vcmp.lt.s32.totalorder %v125, 96
    %vm128 = vmand %vm126, %vm127
    %v131 = vrot.slane %v117, 7
    %vm132 = vcmask 1041409
    %v133 = vsel %vm132, %v131, %v112
    %vm135 = vcmask 261120
    %v137 = vsel %vm135, 0.0, 0
    %139 = vmatprep.subr.mxu0 0.0
    %140 = vmatpush1.msra.mxu0 %v120
    %141 = vmatprep.subr.mxu0 0.0
    %142 = vmatpush1.msra.mxu0 %v121
    %143 = vmatprep.subr.mxu0 0.0
    %144 = vmatpush1.msra.mxu0 %v122
    %145 = vmatprep.subr.mxu0 0.0
    %146 = vmatpush1.msra.mxu0 %v123
    %147 = vmatprep.subr.mxu0 0.0
    %148 = vmatpush1.msra.mxu0 0.0
    %149 = vmatprep.subr.mxu0 0.0
    %150 = vmatpush1.msra.mxu0 0.0
    %151 = vmatprep.subr.mxu0 0.0
    %152 = vmatpush1.msra.mxu0 0.0
    %153 = vmatprep.subr.mxu0 0.0
    %154 = vmatpush1.msra.mxu0 0.0
    %155 = vmatprep.subr.mxu0 0.0
    %156 = vmatpush1.msra.mxu0 0.0
    %157 = vmatprep.subr.mxu0 0.0
    %158 = vmatpush1.msra.mxu0 0.0
    %159 = vmatprep.subr.mxu0 0.0
    %160 = vmatpush1.msra.mxu0 0.0
    %161 = vmatprep.subr.mxu0 0.0
    %162 = vmatpush1.msra.mxu0 0.0
    %163 = vmatprep.subr.mxu0 0.0
    %164 = vmatpush1.msra.mxu0 0.0
    %165 = vmatprep.subr.mxu0 0.0
    %166 = vmatpush1.msra.mxu0 0.0
    %167 = vmatprep.subr.mxu0 0.0
    %168 = vmatpush1.msra.mxu0 0.0
    %169 = vmatprep.subr.mxu0 0.0
    %170 = vmatpush1.msra.mxu0 0.0
    %171 = vmatprep.subr.mxu0 0.0
    %172 = vmatpush1.msra.mxu0 0.0
    %173 = vmatprep.subr.mxu0 0.0
    %174 = vmatpush1.msra.mxu0 0.0
    %175 = vmatprep.subr.mxu0 0.0
    %176 = vmatpush1.msra.mxu0 0.0
    %177 = vmatprep.subr.mxu0 0.0
    %178 = vmatpush1.msra.mxu0 0.0
    %179 = vmatprep.subr.mxu0 0.0
    %180 = vmatpush1.msra.mxu0 0.0
    %181 = vmatprep.subr.mxu0 0.0
    %182 = vmatpush1.msra.mxu0 0.0
    %183 = vmatprep.subr.mxu0 0.0
    %184 = vmatpush1.msra.mxu0 0.0
    %185 = vmatprep.subr.mxu0 0.0
    %186 = vmatpush1.msra.mxu0 0.0
    %187 = vmatprep.subr.mxu0 0.0
    %188 = vmatpush1.msra.mxu0 0.0
    %189 = vmatprep.subr.mxu0 0.0
    %190 = vmatpush1.msra.mxu0 0.0
    %191 = vmatprep.subr.mxu0 0.0
    %192 = vmatpush1.msra.mxu0 0.0
    %193 = vmatprep.subr.mxu0 0.0
    %194 = vmatpush1.msra.mxu0 0.0
    %195 = vmatprep.subr.mxu0 0.0
    %196 = vmatpush1.msra.mxu0 0.0
    %197 = vmatprep.subr.mxu0 0.0
    %198 = vmatpush1.msra.mxu0 0.0
    %199 = vmatprep.subr.mxu0 0.0
    %200 = vmatpush1.msra.mxu0 0.0
    %201 = vmatprep.subr.mxu0 0.0
    %202 = vmatpush1.msra.mxu0 0.0
    %203 = vmatprep.mubr.f32.mxu0 0.0
    %204 = vmatmul.mubr.f32.gmra.mrb[0].mxu0 %v137
    %v205 = vpop.f32.mrb[0].mxu0
    %v206 = vadd.f32 %v133, %v205
    %v207 = vpop.f32.mrb[0].mxu0
    %208 = vdwg.mxu0
    %v209 = vtanh.pop %v206
    %v210 = vxor.u32 %v206, 2147483648
    %v211 = vmul.f32 %v210, 1.442695
    %v212 = vpow.pop %v211
    %v213 = vadd.f32 %v212, 1.0
    %v214 = vrcp.pop %v213
    %v215 = vmul.f32 1.0, %v214
    %v216 = vsel %vm128, %v209, %v215
    %v217 = vmul.f32 %v216, 0.0
    %219 = vrot.lane.b32.xlu0 %v216, 64
    %v220 = vpop.permute.xlu0 %219
    %v222 = vmul.f32 %v216, %v220
    %224 = vrot.lane.b32.xlu0 %v222, 32
    %v225 = vpop.permute.xlu0 %224
    %v227 = vadd.f32 %v217, %v225
    %v228 = vtanh.pop %v227
    %230 = vrot.lane.b32.xlu0 %v228, 64
    %v231 = vpop.permute.xlu0 %230
    %v233 = vmul.f32 %v216, %v231
    %235 = vrot.lane.b32.xlu0 %v233, 32
    %v236 = vpop.permute.xlu0 %235
    %v237 = vrot.slane %v112, 1
    %v238 = vsel %vm132, %v117, %v237
    %v240 = vsel %vm135, %v236, 0
    %242 = vmatprep.subr.mxu0 0.0
    %243 = vmatpush1.msra.mxu0 %v120
    %244 = vmatprep.subr.mxu0 0.0
    %245 = vmatpush1.msra.mxu0 %v121
    %246 = vmatprep.subr.mxu0 0.0
    %247 = vmatpush1.msra.mxu0 %v122
    %248 = vmatprep.subr.mxu0 0.0
    %249 = vmatpush1.msra.mxu0 %v123
    %250 = vmatprep.subr.mxu0 0.0
    %251 = vmatpush1.msra.mxu0 0.0
    %252 = vmatprep.subr.mxu0 0.0
    %253 = vmatpush1.msra.mxu0 0.0
    %254 = vmatprep.subr.mxu0 0.0
    %255 = vmatpush1.msra.mxu0 0.0
    %256 = vmatprep.subr.mxu0 0.0
    %257 = vmatpush1.msra.mxu0 0.0
    %258 = vmatprep.subr.mxu0 0.0
    %259 = vmatpush1.msra.mxu0 0.0
    %260 = vmatprep.subr.mxu0 0.0
    %261 = vmatpush1.msra.mxu0 0.0
    %262 = vmatprep.subr.mxu0 0.0
    %263 = vmatpush1.msra.mxu0 0.0
    %264 = vmatprep.subr.mxu0 0.0
    %265 = vmatpush1.msra.mxu0 0.0
    %266 = vmatprep.subr.mxu0 0.0
    %267 = vmatpush1.msra.mxu0 0.0
    %268 = vmatprep.subr.mxu0 0.0
    %269 = vmatpush1.msra.mxu0 0.0
    %270 = vmatprep.subr.mxu0 0.0
    %271 = vmatpush1.msra.mxu0 0.0
    %272 = vmatprep.subr.mxu0 0.0
    %273 = vmatpush1.msra.mxu0 0.0
    %274 = vmatprep.subr.mxu0 0.0
    %275 = vmatpush1.msra.mxu0 0.0
    %276 = vmatprep.subr.mxu0 0.0
    %277 = vmatpush1.msra.mxu0 0.0
    %278 = vmatprep.subr.mxu0 0.0
    %279 = vmatpush1.msra.mxu0 0.0
    %280 = vmatprep.subr.mxu0 0.0
    %281 = vmatpush1.msra.mxu0 0.0
    %282 = vmatprep.subr.mxu0 0.0
    %283 = vmatpush1.msra.mxu0 0.0
    %284 = vmatprep.subr.mxu0 0.0
    %285 = vmatpush1.msra.mxu0 0.0
    %286 = vmatprep.subr.mxu0 0.0
    %287 = vmatpush1.msra.mxu0 0.0
    %288 = vmatprep.subr.mxu0 0.0
    %289 = vmatpush1.msra.mxu0 0.0
    %290 = vmatprep.subr.mxu0 0.0
    %291 = vmatpush1.msra.mxu0 0.0
    %292 = vmatprep.subr.mxu0 0.0
    %293 = vmatpush1.msra.mxu0 0.0
    %294 = vmatprep.subr.mxu0 0.0
    %295 = vmatpush1.msra.mxu0 0.0
    %296 = vmatprep.subr.mxu0 0.0
    %297 = vmatpush1.msra.mxu0 0.0
    %298 = vmatprep.subr.mxu0 0.0
    %299 = vmatpush1.msra.mxu0 0.0
    %300 = vmatprep.subr.mxu0 0.0
    %301 = vmatpush1.msra.mxu0 0.0
    %302 = vmatprep.subr.mxu0 0.0
    %303 = vmatpush1.msra.mxu0 0.0
    %304 = vmatprep.subr.mxu0 0.0
    %305 = vmatpush1.msra.mxu0 0.0
    %306 = vmatprep.mubr.f32.mxu0 0.0
    %307 = vmatmul.mubr.f32.gmra.mrb[0].mxu0 %v240
    %v308 = vpop.f32.mrb[0].mxu0
    %v309 = vadd.f32 %v238, %v308
    %v310 = vpop.f32.mrb[0].mxu0
    %311 = vdwg.mxu0
    %v312 = vtanh.pop %v309
    %v313 = vxor.u32 %v309, 2147483648
    %v314 = vmul.f32 %v313, 1.442695
    %v315 = vpow.pop %v314
    %v316 = vadd.f32 %v315, 1.0
    %v317 = vrcp.pop %v316
    %v318 = vmul.f32 1.0, %v317
    %v319 = vsel %vm128, %v312, %v318
    %v320 = vmul.f32 %v319, %v227
    %322 = vrot.lane.b32.xlu0 %v319, 64
    %v323 = vpop.permute.xlu0 %322
    %v325 = vmul.f32 %v319, %v323
    %327 = vrot.lane.b32.xlu0 %v325, 32
    %v328 = vpop.permute.xlu0 %327
    %v330 = vadd.f32 %v320, %v328
    %v331 = vtanh.pop %v330
    %333 = vrot.lane.b32.xlu0 %v331, 64
    %v334 = vpop.permute.xlu0 %333
    %v336 = vmul.f32 %v319, %v334
    %338 = vrot.lane.b32.xlu0 %v336, 32
    %v339 = vpop.permute.xlu0 %338
    %v340 = vrot.slane %v112, 2
    %v341 = vrot.slane %v117, 1
    %v342 = vsel %vm132, %v341, %v340
    %v344 = vsel %vm135, %v339, 0
    %346 = vmatprep.subr.mxu0 0.0
    %347 = vmatpush1.msra.mxu0 %v120
    %348 = vmatprep.subr.mxu0 0.0
    %349 = vmatpush1.msra.mxu0 %v121
    %350 = vmatprep.subr.mxu0 0.0
    %351 = vmatpush1.msra.mxu0 %v122
    %352 = vmatprep.subr.mxu0 0.0
    %353 = vmatpush1.msra.mxu0 %v123
    %354 = vmatprep.subr.mxu0 0.0
    %355 = vmatpush1.msra.mxu0 0.0
    %356 = vmatprep.subr.mxu0 0.0
    %357 = vmatpush1.msra.mxu0 0.0
    %358 = vmatprep.subr.mxu0 0.0
    %359 = vmatpush1.msra.mxu0 0.0
    %360 = vmatprep.subr.mxu0 0.0
    %361 = vmatpush1.msra.mxu0 0.0
    %362 = vmatprep.subr.mxu0 0.0
    %363 = vmatpush1.msra.mxu0 0.0
    %364 = vmatprep.subr.mxu0 0.0
    %365 = vmatpush1.msra.mxu0 0.0
    %366 = vmatprep.subr.mxu0 0.0
    %367 = vmatpush1.msra.mxu0 0.0
    %368 = vmatprep.subr.mxu0 0.0
    %369 = vmatpush1.msra.mxu0 0.0
    %370 = vmatprep.subr.mxu0 0.0
    %371 = vmatpush1.msra.mxu0 0.0
    %372 = vmatprep.subr.mxu0 0.0
    %373 = vmatpush1.msra.mxu0 0.0
    %374 = vmatprep.subr.mxu0 0.0
    %375 = vmatpush1.msra.mxu0 0.0
    %376 = vmatprep.subr.mxu0 0.0
    %377 = vmatpush1.msra.mxu0 0.0
    %378 = vmatprep.subr.mxu0 0.0
    %379 = vmatpush1.msra.mxu0 0.0
    %380 = vmatprep.subr.mxu0 0.0
    %381 = vmatpush1.msra.mxu0 0.0
    %382 = vmatprep.subr.mxu0 0.0
    %383 = vmatpush1.msra.mxu0 0.0
    %384 = vmatprep.subr.mxu0 0.0
    %385 = vmatpush1.msra.mxu0 0.0
    %386 = vmatprep.subr.mxu0 0.0
    %387 = vmatpush1.msra.mxu0 0.0
    %388 = vmatprep.subr.mxu0 0.0
    %389 = vmatpush1.msra.mxu0 0.0
    %390 = vmatprep.subr.mxu0 0.0
    %391 = vmatpush1.msra.mxu0 0.0
    %392 = vmatprep.subr.mxu0 0.0
    %393 = vmatpush1.msra.mxu0 0.0
    %394 = vmatprep.subr.mxu0 0.0
    %395 = vmatpush1.msra.mxu0 0.0
    %396 = vmatprep.subr.mxu0 0.0
    %397 = vmatpush1.msra.mxu0 0.0
    %398 = vmatprep.subr.mxu0 0.0
    %399 = vmatpush1.msra.mxu0 0.0
    %400 = vmatprep.subr.mxu0 0.0
    %401 = vmatpush1.msra.mxu0 0.0
    %402 = vmatprep.subr.mxu0 0.0
    %403 = vmatpush1.msra.mxu0 0.0
    %404 = vmatprep.subr.mxu0 0.0
    %405 = vmatpush1.msra.mxu0 0.0
    %406 = vmatprep.subr.mxu0 0.0
    %407 = vmatpush1.msra.mxu0 0.0
    %408 = vmatprep.subr.mxu0 0.0
    %409 = vmatpush1.msra.mxu0 0.0
    %410 = vmatprep.mubr.f32.mxu0 0.0
    %411 = vmatmul.mubr.f32.gmra.mrb[0].mxu0 %v344
    %v412 = vpop.f32.mrb[0].mxu0
    %v413 = vadd.f32 %v342, %v412
    %v414 = vpop.f32.mrb[0].mxu0
    %415 = vdwg.mxu0
    %v416 = vtanh.pop %v413
    %v417 = vxor.u32 %v413, 2147483648
    %v418 = vmul.f32 %v417, 1.442695
    %v419 = vpow.pop %v418
    %v420 = vadd.f32 %v419, 1.0
    %v421 = vrcp.pop %v420
    %v422 = vmul.f32 1.0, %v421
    %v423 = vsel %vm128, %v416, %v422
    %v424 = vmul.f32 %v423, %v330
    %426 = vrot.lane.b32.xlu0 %v423, 64
    %v427 = vpop.permute.xlu0 %426
    %v429 = vmul.f32 %v423, %v427
    %431 = vrot.lane.b32.xlu0 %v429, 32
    %v432 = vpop.permute.xlu0 %431
    %v434 = vadd.f32 %v424, %v432
    %v435 = vtanh.pop %v434
    %437 = vrot.lane.b32.xlu0 %v435, 64
    %v438 = vpop.permute.xlu0 %437
    %v440 = vmul.f32 %v423, %v438
    %442 = vrot.lane.b32.xlu0 %v440, 32
    %v443 = vpop.permute.xlu0 %442
    %v444 = vrot.slane %v112, 3
    %v445 = vrot.slane %v117, 2
    %v446 = vsel %vm132, %v445, %v444
    %v448 = vsel %vm135, %v443, 0
    %450 = vmatprep.subr.mxu0 0.0
    %451 = vmatpush1.msra.mxu0 %v120
    %452 = vmatprep.subr.mxu0 0.0
    %453 = vmatpush1.msra.mxu0 %v121
    %454 = vmatprep.subr.mxu0 0.0
    %455 = vmatpush1.msra.mxu0 %v122
    %456 = vmatprep.subr.mxu0 0.0
    %457 = vmatpush1.msra.mxu0 %v123
    %458 = vmatprep.subr.mxu0 0.0
    %459 = vmatpush1.msra.mxu0 0.0
    %460 = vmatprep.subr.mxu0 0.0
    %461 = vmatpush1.msra.mxu0 0.0
    %462 = vmatprep.subr.mxu0 0.0
    %463 = vmatpush1.msra.mxu0 0.0
    %464 = vmatprep.subr.mxu0 0.0
    %465 = vmatpush1.msra.mxu0 0.0
    %466 = vmatprep.subr.mxu0 0.0
    %467 = vmatpush1.msra.mxu0 0.0
    %468 = vmatprep.subr.mxu0 0.0
    %469 = vmatpush1.msra.mxu0 0.0
    %470 = vmatprep.subr.mxu0 0.0
    %471 = vmatpush1.msra.mxu0 0.0
    %472 = vmatprep.subr.mxu0 0.0
    %473 = vmatpush1.msra.mxu0 0.0
    %474 = vmatprep.subr.mxu0 0.0
    %475 = vmatpush1.msra.mxu0 0.0
    %476 = vmatprep.subr.mxu0 0.0
    %477 = vmatpush1.msra.mxu0 0.0
    %478 = vmatprep.subr.mxu0 0.0
    %479 = vmatpush1.msra.mxu0 0.0
    %480 = vmatprep.subr.mxu0 0.0
    %481 = vmatpush1.msra.mxu0 0.0
    %482 = vmatprep.subr.mxu0 0.0
    %483 = vmatpush1.msra.mxu0 0.0
    %484 = vmatprep.subr.mxu0 0.0
    %485 = vmatpush1.msra.mxu0 0.0
    %486 = vmatprep.subr.mxu0 0.0
    %487 = vmatpush1.msra.mxu0 0.0
    %488 = vmatprep.subr.mxu0 0.0
    %489 = vmatpush1.msra.mxu0 0.0
    %490 = vmatprep.subr.mxu0 0.0
    %491 = vmatpush1.msra.mxu0 0.0
    %492 = vmatprep.subr.mxu0 0.0
    %493 = vmatpush1.msra.mxu0 0.0
    %494 = vmatprep.subr.mxu0 0.0
    %495 = vmatpush1.msra.mxu0 0.0
    %496 = vmatprep.subr.mxu0 0.0
    %497 = vmatpush1.msra.mxu0 0.0
    %498 = vmatprep.subr.mxu0 0.0
    %499 = vmatpush1.msra.mxu0 0.0
    %500 = vmatprep.subr.mxu0 0.0
    %501 = vmatpush1.msra.mxu0 0.0
    %502 = vmatprep.subr.mxu0 0.0
    %503 = vmatpush1.msra.mxu0 0.0
    %504 = vmatprep.subr.mxu0 0.0
    %505 = vmatpush1.msra.mxu0 0.0
    %506 = vmatprep.subr.mxu0 0.0
    %507 = vmatpush1.msra.mxu0 0.0
    %508 = vmatprep.subr.mxu0 0.0
    %509 = vmatpush1.msra.mxu0 0.0
    %510 = vmatprep.subr.mxu0 0.0
    %511 = vmatpush1.msra.mxu0 0.0
    %512 = vmatprep.subr.mxu0 0.0
    %513 = vmatpush1.msra.mxu0 0.0
    %514 = vmatprep.mubr.f32.mxu0 0.0
    %515 = vmatmul.mubr.f32.gmra.mrb[0].mxu0 %v448
    %v516 = vpop.f32.mrb[0].mxu0
    %v517 = vadd.f32 %v446, %v516
    %v518 = vpop.f32.mrb[0].mxu0
    %519 = vdwg.mxu0
    %v520 = vtanh.pop %v517
    %v521 = vxor.u32 %v517, 2147483648
    %v522 = vmul.f32 %v521, 1.442695
    %v523 = vpow.pop %v522
    %v524 = vadd.f32 %v523, 1.0
    %v525 = vrcp.pop %v524
    %v526 = vmul.f32 1.0, %v525
    %v527 = vsel %vm128, %v520, %v526
    %v528 = vmul.f32 %v527, %v434
    %530 = vrot.lane.b32.xlu0 %v527, 64
    %v531 = vpop.permute.xlu0 %530
    %v533 = vmul.f32 %v527, %v531
    %535 = vrot.lane.b32.xlu0 %v533, 32
    %v536 = vpop.permute.xlu0 %535
    %v538 = vadd.f32 %v528, %v536
    %v539 = vtanh.pop %v538
    %541 = vrot.lane.b32.xlu0 %v539, 64
    %v542 = vpop.permute.xlu0 %541
    %v544 = vmul.f32 %v527, %v542
    %546 = vrot.lane.b32.xlu0 %v544, 32
    %v547 = vpop.permute.xlu0 %546
    %v548 = vrot.slane %v112, 4
    %v549 = vrot.slane %v117, 3
    %v550 = vsel %vm132, %v549, %v548
    %v552 = vsel %vm135, %v547, 0
    %554 = vmatprep.subr.mxu0 0.0
    %555 = vmatpush1.msra.mxu0 %v120
    %556 = vmatprep.subr.mxu0 0.0
    %557 = vmatpush1.msra.mxu0 %v121
    %558 = vmatprep.subr.mxu0 0.0
    %559 = vmatpush1.msra.mxu0 %v122
    %560 = vmatprep.subr.mxu0 0.0
    %561 = vmatpush1.msra.mxu0 %v123
    %562 = vmatprep.subr.mxu0 0.0
    %563 = vmatpush1.msra.mxu0 0.0
    %564 = vmatprep.subr.mxu0 0.0
    %565 = vmatpush1.msra.mxu0 0.0
    %566 = vmatprep.subr.mxu0 0.0
    %567 = vmatpush1.msra.mxu0 0.0
    %568 = vmatprep.subr.mxu0 0.0
    %569 = vmatpush1.msra.mxu0 0.0
    %570 = vmatprep.subr.mxu0 0.0
    %571 = vmatpush1.msra.mxu0 0.0
    %572 = vmatprep.subr.mxu0 0.0
    %573 = vmatpush1.msra.mxu0 0.0
    %574 = vmatprep.subr.mxu0 0.0
    %575 = vmatpush1.msra.mxu0 0.0
    %576 = vmatprep.subr.mxu0 0.0
    %577 = vmatpush1.msra.mxu0 0.0
    %578 = vmatprep.subr.mxu0 0.0
    %579 = vmatpush1.msra.mxu0 0.0
    %580 = vmatprep.subr.mxu0 0.0
    %581 = vmatpush1.msra.mxu0 0.0
    %582 = vmatprep.subr.mxu0 0.0
    %583 = vmatpush1.msra.mxu0 0.0
    %584 = vmatprep.subr.mxu0 0.0
    %585 = vmatpush1.msra.mxu0 0.0
    %586 = vmatprep.subr.mxu0 0.0
    %587 = vmatpush1.msra.mxu0 0.0
    %588 = vmatprep.subr.mxu0 0.0
    %589 = vmatpush1.msra.mxu0 0.0
    %590 = vmatprep.subr.mxu0 0.0
    %591 = vmatpush1.msra.mxu0 0.0
    %592 = vmatprep.subr.mxu0 0.0
    %593 = vmatpush1.msra.mxu0 0.0
    %594 = vmatprep.subr.mxu0 0.0
    %595 = vmatpush1.msra.mxu0 0.0
    %596 = vmatprep.subr.mxu0 0.0
    %597 = vmatpush1.msra.mxu0 0.0
    %598 = vmatprep.subr.mxu0 0.0
    %599 = vmatpush1.msra.mxu0 0.0
    %600 = vmatprep.subr.mxu0 0.0
    %601 = vmatpush1.msra.mxu0 0.0
    %602 = vmatprep.subr.mxu0 0.0
    %603 = vmatpush1.msra.mxu0 0.0
    %604 = vmatprep.subr.mxu0 0.0
    %605 = vmatpush1.msra.mxu0 0.0
    %606 = vmatprep.subr.mxu0 0.0
    %607 = vmatpush1.msra.mxu0 0.0
    %608 = vmatprep.subr.mxu0 0.0
    %609 = vmatpush1.msra.mxu0 0.0
    %610 = vmatprep.subr.mxu0 0.0
    %611 = vmatpush1.msra.mxu0 0.0
    %612 = vmatprep.subr.mxu0 0.0
    %613 = vmatpush1.msra.mxu0 0.0
    %614 = vmatprep.subr.mxu0 0.0
    %615 = vmatpush1.msra.mxu0 0.0
    %616 = vmatprep.subr.mxu0 0.0
    %617 = vmatpush1.msra.mxu0 0.0
    %618 = vmatprep.mubr.f32.mxu0 0.0
    %619 = vmatmul.mubr.f32.gmra.mrb[0].mxu0 %v552
    %v620 = vpop.f32.mrb[0].mxu0
    %v621 = vadd.f32 %v550, %v620
    %v622 = vpop.f32.mrb[0].mxu0
    %623 = vdwg.mxu0
    %v624 = vtanh.pop %v621
    %v625 = vxor.u32 %v621, 2147483648
    %v626 = vmul.f32 %v625, 1.442695
    %v627 = vpow.pop %v626
    %v628 = vadd.f32 %v627, 1.0
    %v629 = vrcp.pop %v628
    %v630 = vmul.f32 1.0, %v629
    %v631 = vsel %vm128, %v624, %v630
    %v632 = vmul.f32 %v631, %v538
    %634 = vrot.lane.b32.xlu0 %v631, 64
    %v635 = vpop.permute.xlu0 %634
    %v637 = vmul.f32 %v631, %v635
    %639 = vrot.lane.b32.xlu0 %v637, 32
    %v640 = vpop.permute.xlu0 %639
    %v642 = vadd.f32 %v632, %v640
    %v643 = vtanh.pop %v642
    %645 = vrot.lane.b32.xlu0 %v643, 64
    %v646 = vpop.permute.xlu0 %645
    %v648 = vmul.f32 %v631, %v646
    %650 = vrot.lane.b32.xlu0 %v648, 32
    %v651 = vpop.permute.xlu0 %650
    %v652 = vrot.slane %v112, 5
    %v653 = vrot.slane %v117, 4
    %v654 = vsel %vm132, %v653, %v652
    %v656 = vsel %vm135, %v651, 0
    %658 = vmatprep.subr.mxu0 0.0
    %659 = vmatpush1.msra.mxu0 %v120
    %660 = vmatprep.subr.mxu0 0.0
    %661 = vmatpush1.msra.mxu0 %v121
    %662 = vmatprep.subr.mxu0 0.0
    %663 = vmatpush1.msra.mxu0 %v122
    %664 = vmatprep.subr.mxu0 0.0
    %665 = vmatpush1.msra.mxu0 %v123
    %666 = vmatprep.subr.mxu0 0.0
    %667 = vmatpush1.msra.mxu0 0.0
    %668 = vmatprep.subr.mxu0 0.0
    %669 = vmatpush1.msra.mxu0 0.0
    %670 = vmatprep.subr.mxu0 0.0
    %671 = vmatpush1.msra.mxu0 0.0
    %672 = vmatprep.subr.mxu0 0.0
    %673 = vmatpush1.msra.mxu0 0.0
    %674 = vmatprep.subr.mxu0 0.0
    %675 = vmatpush1.msra.mxu0 0.0
    %676 = vmatprep.subr.mxu0 0.0
    %677 = vmatpush1.msra.mxu0 0.0
    %678 = vmatprep.subr.mxu0 0.0
    %679 = vmatpush1.msra.mxu0 0.0
    %680 = vmatprep.subr.mxu0 0.0
    %681 = vmatpush1.msra.mxu0 0.0
    %682 = vmatprep.subr.mxu0 0.0
    %683 = vmatpush1.msra.mxu0 0.0
    %684 = vmatprep.subr.mxu0 0.0
    %685 = vmatpush1.msra.mxu0 0.0
    %686 = vmatprep.subr.mxu0 0.0
    %687 = vmatpush1.msra.mxu0 0.0
    %688 = vmatprep.subr.mxu0 0.0
    %689 = vmatpush1.msra.mxu0 0.0
    %690 = vmatprep.subr.mxu0 0.0
    %691 = vmatpush1.msra.mxu0 0.0
    %692 = vmatprep.subr.mxu0 0.0
    %693 = vmatpush1.msra.mxu0 0.0
    %694 = vmatprep.subr.mxu0 0.0
    %695 = vmatpush1.msra.mxu0 0.0
    %696 = vmatprep.subr.mxu0 0.0
    %697 = vmatpush1.msra.mxu0 0.0
    %698 = vmatprep.subr.mxu0 0.0
    %699 = vmatpush1.msra.mxu0 0.0
    %700 = vmatprep.subr.mxu0 0.0
    %701 = vmatpush1.msra.mxu0 0.0
    %702 = vmatprep.subr.mxu0 0.0
    %703 = vmatpush1.msra.mxu0 0.0
    %704 = vmatprep.subr.mxu0 0.0
    %705 = vmatpush1.msra.mxu0 0.0
    %706 = vmatprep.subr.mxu0 0.0
    %707 = vmatpush1.msra.mxu0 0.0
    %708 = vmatprep.subr.mxu0 0.0
    %709 = vmatpush1.msra.mxu0 0.0
    %710 = vmatprep.subr.mxu0 0.0
    %711 = vmatpush1.msra.mxu0 0.0
    %712 = vmatprep.subr.mxu0 0.0
    %713 = vmatpush1.msra.mxu0 0.0
    %714 = vmatprep.subr.mxu0 0.0
    %715 = vmatpush1.msra.mxu0 0.0
    %716 = vmatprep.subr.mxu0 0.0
    %717 = vmatpush1.msra.mxu0 0.0
    %718 = vmatprep.subr.mxu0 0.0
    %719 = vmatpush1.msra.mxu0 0.0
    %720 = vmatprep.subr.mxu0 0.0
    %721 = vmatpush1.msra.mxu0 0.0
    %722 = vmatprep.mubr.f32.mxu0 0.0
    %723 = vmatmul.mubr.f32.gmra.mrb[0].mxu0 %v656
    %v724 = vpop.f32.mrb[0].mxu0
    %v725 = vadd.f32 %v654, %v724
    %v726 = vpop.f32.mrb[0].mxu0
    %727 = vdwg.mxu0
    %v728 = vtanh.pop %v725
    %v729 = vxor.u32 %v725, 2147483648
    %v730 = vmul.f32 %v729, 1.442695
    %v731 = vpow.pop %v730
    %v732 = vadd.f32 %v731, 1.0
    %v733 = vrcp.pop %v732
    %v734 = vmul.f32 1.0, %v733
    %v735 = vsel %vm128, %v728, %v734
    %v736 = vmul.f32 %v735, %v642
    %738 = vrot.lane.b32.xlu0 %v735, 64
    %v739 = vpop.permute.xlu0 %738
    %v741 = vmul.f32 %v735, %v739
    %743 = vrot.lane.b32.xlu0 %v741, 32
    %v744 = vpop.permute.xlu0 %743
    %v746 = vadd.f32 %v736, %v744
    %v747 = vtanh.pop %v746
    %749 = vrot.lane.b32.xlu0 %v747, 64
    %v750 = vpop.permute.xlu0 %749
    %v752 = vmul.f32 %v735, %v750
    %754 = vrot.lane.b32.xlu0 %v752, 32
    %v755 = vpop.permute.xlu0 %754
    %v756 = vrot.slane %v112, 6
    %v757 = vrot.slane %v117, 5
    %v758 = vsel %vm132, %v757, %v756
    %v760 = vsel %vm135, %v755, 0
    %762 = vmatprep.subr.mxu0 0.0
    %763 = vmatpush1.msra.mxu0 %v120
    %764 = vmatprep.subr.mxu0 0.0
    %765 = vmatpush1.msra.mxu0 %v121
    %766 = vmatprep.subr.mxu0 0.0
    %767 = vmatpush1.msra.mxu0 %v122
    %768 = vmatprep.subr.mxu0 0.0
    %769 = vmatpush1.msra.mxu0 %v123
    %770 = vmatprep.subr.mxu0 0.0
    %771 = vmatpush1.msra.mxu0 0.0
    %772 = vmatprep.subr.mxu0 0.0
    %773 = vmatpush1.msra.mxu0 0.0
    %774 = vmatprep.subr.mxu0 0.0
    %775 = vmatpush1.msra.mxu0 0.0
    %776 = vmatprep.subr.mxu0 0.0
    %777 = vmatpush1.msra.mxu0 0.0
    %778 = vmatprep.subr.mxu0 0.0
    %779 = vmatpush1.msra.mxu0 0.0
    %780 = vmatprep.subr.mxu0 0.0
    %781 = vmatpush1.msra.mxu0 0.0
    %782 = vmatprep.subr.mxu0 0.0
    %783 = vmatpush1.msra.mxu0 0.0
    %784 = vmatprep.subr.mxu0 0.0
    %785 = vmatpush1.msra.mxu0 0.0
    %786 = vmatprep.subr.mxu0 0.0
    %787 = vmatpush1.msra.mxu0 0.0
    %788 = vmatprep.subr.mxu0 0.0
    %789 = vmatpush1.msra.mxu0 0.0
    %790 = vmatprep.subr.mxu0 0.0
    %791 = vmatpush1.msra.mxu0 0.0
    %792 = vmatprep.subr.mxu0 0.0
    %793 = vmatpush1.msra.mxu0 0.0
    %794 = vmatprep.subr.mxu0 0.0
    %795 = vmatpush1.msra.mxu0 0.0
    %796 = vmatprep.subr.mxu0 0.0
    %797 = vmatpush1.msra.mxu0 0.0
    %798 = vmatprep.subr.mxu0 0.0
    %799 = vmatpush1.msra.mxu0 0.0
    %800 = vmatprep.subr.mxu0 0.0
    %801 = vmatpush1.msra.mxu0 0.0
    %802 = vmatprep.subr.mxu0 0.0
    %803 = vmatpush1.msra.mxu0 0.0
    %804 = vmatprep.subr.mxu0 0.0
    %805 = vmatpush1.msra.mxu0 0.0
    %806 = vmatprep.subr.mxu0 0.0
    %807 = vmatpush1.msra.mxu0 0.0
    %808 = vmatprep.subr.mxu0 0.0
    %809 = vmatpush1.msra.mxu0 0.0
    %810 = vmatprep.subr.mxu0 0.0
    %811 = vmatpush1.msra.mxu0 0.0
    %812 = vmatprep.subr.mxu0 0.0
    %813 = vmatpush1.msra.mxu0 0.0
    %814 = vmatprep.subr.mxu0 0.0
    %815 = vmatpush1.msra.mxu0 0.0
    %816 = vmatprep.subr.mxu0 0.0
    %817 = vmatpush1.msra.mxu0 0.0
    %818 = vmatprep.subr.mxu0 0.0
    %819 = vmatpush1.msra.mxu0 0.0
    %820 = vmatprep.subr.mxu0 0.0
    %821 = vmatpush1.msra.mxu0 0.0
    %822 = vmatprep.subr.mxu0 0.0
    %823 = vmatpush1.msra.mxu0 0.0
    %824 = vmatprep.subr.mxu0 0.0
    %825 = vmatpush1.msra.mxu0 0.0
    %826 = vmatprep.mubr.f32.mxu0 0.0
    %827 = vmatmul.mubr.f32.gmra.mrb[0].mxu0 %v760
    %v828 = vpop.f32.mrb[0].mxu0
    %v829 = vadd.f32 %v758, %v828
    %v830 = vpop.f32.mrb[0].mxu0
    %831 = vdwg.mxu0
    %v832 = vtanh.pop %v829
    %v833 = vxor.u32 %v829, 2147483648
    %v834 = vmul.f32 %v833, 1.442695
    %v835 = vpow.pop %v834
    %v836 = vadd.f32 %v835, 1.0
    %v837 = vrcp.pop %v836
    %v838 = vmul.f32 1.0, %v837
    %v839 = vsel %vm128, %v832, %v838
    %v840 = vmul.f32 %v839, %v746
    %842 = vrot.lane.b32.xlu0 %v839, 64
    %v843 = vpop.permute.xlu0 %842
    %v845 = vmul.f32 %v839, %v843
    %847 = vrot.lane.b32.xlu0 %v845, 32
    %v848 = vpop.permute.xlu0 %847
    %v850 = vadd.f32 %v840, %v848
    %v851 = vtanh.pop %v850
    %853 = vrot.lane.b32.xlu0 %v851, 64
    %v854 = vpop.permute.xlu0 %853
    %v856 = vmul.f32 %v839, %v854
    %858 = vrot.lane.b32.xlu0 %v856, 32
    %v859 = vpop.permute.xlu0 %858
    %v860 = vrot.slane %v112, 7
    %v861 = vrot.slane %v117, 6
    %v862 = vsel %vm132, %v861, %v860
    %v864 = vsel %vm135, %v859, 0
    %866 = vmatprep.subr.mxu0 0.0
    %867 = vmatpush1.msra.mxu0 %v120
    %868 = vmatprep.subr.mxu0 0.0
    %869 = vmatpush1.msra.mxu0 %v121
    %870 = vmatprep.subr.mxu0 0.0
    %871 = vmatpush1.msra.mxu0 %v122
    %872 = vmatprep.subr.mxu0 0.0
    %873 = vmatpush1.msra.mxu0 %v123
    %874 = vmatprep.subr.mxu0 0.0
    %875 = vmatpush1.msra.mxu0 0.0
    %876 = vmatprep.subr.mxu0 0.0
    %877 = vmatpush1.msra.mxu0 0.0
    %878 = vmatprep.subr.mxu0 0.0
    %879 = vmatpush1.msra.mxu0 0.0
    %880 = vmatprep.subr.mxu0 0.0
    %881 = vmatpush1.msra.mxu0 0.0
    %882 = vmatprep.subr.mxu0 0.0
    %883 = vmatpush1.msra.mxu0 0.0
    %884 = vmatprep.subr.mxu0 0.0
    %885 = vmatpush1.msra.mxu0 0.0
    %886 = vmatprep.subr.mxu0 0.0
    %887 = vmatpush1.msra.mxu0 0.0
    %888 = vmatprep.subr.mxu0 0.0
    %889 = vmatpush1.msra.mxu0 0.0
    %890 = vmatprep.subr.mxu0 0.0
    %891 = vmatpush1.msra.mxu0 0.0
    %892 = vmatprep.subr.mxu0 0.0
    %893 = vmatpush1.msra.mxu0 0.0
    %894 = vmatprep.subr.mxu0 0.0
    %895 = vmatpush1.msra.mxu0 0.0
    %896 = vmatprep.subr.mxu0 0.0
    %897 = vmatpush1.msra.mxu0 0.0
    %898 = vmatprep.subr.mxu0 0.0
    %899 = vmatpush1.msra.mxu0 0.0
    %900 = vmatprep.subr.mxu0 0.0
    %901 = vmatpush1.msra.mxu0 0.0
    %902 = vmatprep.subr.mxu0 0.0
    %903 = vmatpush1.msra.mxu0 0.0
    %904 = vmatprep.subr.mxu0 0.0
    %905 = vmatpush1.msra.mxu0 0.0
    %906 = vmatprep.subr.mxu0 0.0
    %907 = vmatpush1.msra.mxu0 0.0
    %908 = vmatprep.subr.mxu0 0.0
    %909 = vmatpush1.msra.mxu0 0.0
    %910 = vmatprep.subr.mxu0 0.0
    %911 = vmatpush1.msra.mxu0 0.0
    %912 = vmatprep.subr.mxu0 0.0
    %913 = vmatpush1.msra.mxu0 0.0
    %914 = vmatprep.subr.mxu0 0.0
    %915 = vmatpush1.msra.mxu0 0.0
    %916 = vmatprep.subr.mxu0 0.0
    %917 = vmatpush1.msra.mxu0 0.0
    %918 = vmatprep.subr.mxu0 0.0
    %919 = vmatpush1.msra.mxu0 0.0
    %920 = vmatprep.subr.mxu0 0.0
    %921 = vmatpush1.msra.mxu0 0.0
    %922 = vmatprep.subr.mxu0 0.0
    %923 = vmatpush1.msra.mxu0 0.0
    %924 = vmatprep.subr.mxu0 0.0
    %925 = vmatpush1.msra.mxu0 0.0
    %926 = vmatprep.subr.mxu0 0.0
    %927 = vmatpush1.msra.mxu0 0.0
    %928 = vmatprep.subr.mxu0 0.0
    %929 = vmatpush1.msra.mxu0 0.0
    %930 = vmatprep.mubr.f32.mxu0 0.0
    %931 = vmatmul.mubr.f32.gmra.mrb[0].mxu0 %v864
    %v932 = vpop.f32.mrb[0].mxu0
    %v933 = vadd.f32 %v862, %v932
    %v934 = vpop.f32.mrb[0].mxu0
    %935 = vdwg.mxu0
    %v936 = vtanh.pop %v933
    %v937 = vxor.u32 %v933, 2147483648
    %v938 = vmul.f32 %v937, 1.442695
    %v939 = vpow.pop %v938
    %v940 = vadd.f32 %v939, 1.0
    %v941 = vrcp.pop %v940
    %v942 = vmul.f32 1.0, %v941
    %v943 = vsel %vm128, %v936, %v942
    %v944 = vmul.f32 %v943, %v850
    %946 = vrot.lane.b32.xlu0 %v943, 64
    %v947 = vpop.permute.xlu0 %946
    %v949 = vmul.f32 %v943, %v947
    %951 = vrot.lane.b32.xlu0 %v949, 32
    %v952 = vpop.permute.xlu0 %951
    %v954 = vadd.f32 %v944, %v952
    %v955 = vtanh.pop %v954
    %957 = vrot.lane.b32.xlu0 %v955, 64
    %v958 = vpop.permute.xlu0 %957
    %v960 = vmul.f32 %v943, %v958
    %v961 = vld [vmem:[%s4] sm:$0xff]
    %v962 = vld [vmem:[%s4 + $0x8] sm:$0xff]
    %v963 = vld [vmem:[%s4 + $0x10] sm:$0xff]
    %v964 = vld [vmem:[%s4 + $0x18] sm:$0xff]
    %v965 = vld [vmem:[%s5] sm:$0x1]
    %v967 = vlaneseq
    %v968 = vshrl.u32 %v967, 7
    %v969 = vsub.s32 0, %v968
    %v970 = vrot.slane %v965, %v969
    %973 = vrot.lane.b32.xlu0 %v960, 32
    %v974 = vpop.permute.xlu0 %973
    %v975 = vsel %vm135, %v974, 0
    %977 = vmatprep.subr.mxu0 0.0
    %978 = vmatpush1.msra.mxu0 %v961
    %979 = vmatprep.subr.mxu0 0.0
    %980 = vmatpush1.msra.mxu0 %v962
    %981 = vmatprep.subr.mxu0 0.0
    %982 = vmatpush1.msra.mxu0 %v963
    %983 = vmatprep.subr.mxu0 0.0
    %984 = vmatpush1.msra.mxu0 %v964
    %985 = vmatprep.subr.mxu0 0.0
    %986 = vmatpush1.msra.mxu0 0.0
    %987 = vmatprep.subr.mxu0 0.0
    %988 = vmatpush1.msra.mxu0 0.0
    %989 = vmatprep.subr.mxu0 0.0
    %990 = vmatpush1.msra.mxu0 0.0
    %991 = vmatprep.subr.mxu0 0.0
    %992 = vmatpush1.msra.mxu0 0.0
    %993 = vmatprep.subr.mxu0 0.0
    %994 = vmatpush1.msra.mxu0 0.0
    %995 = vmatprep.subr.mxu0 0.0
    %996 = vmatpush1.msra.mxu0 0.0
    %997 = vmatprep.subr.mxu0 0.0
    %998 = vmatpush1.msra.mxu0 0.0
    %999 = vmatprep.subr.mxu0 0.0
    %1000 = vmatpush1.msra.mxu0 0.0
    %1001 = vmatprep.subr.mxu0 0.0
    %1002 = vmatpush1.msra.mxu0 0.0
    %1003 = vmatprep.subr.mxu0 0.0
    %1004 = vmatpush1.msra.mxu0 0.0
    %1005 = vmatprep.subr.mxu0 0.0
    %1006 = vmatpush1.msra.mxu0 0.0
    %1007 = vmatprep.subr.mxu0 0.0
    %1008 = vmatpush1.msra.mxu0 0.0
    %1009 = vmatprep.subr.mxu0 0.0
    %1010 = vmatpush1.msra.mxu0 0.0
    %1011 = vmatprep.subr.mxu0 0.0
    %1012 = vmatpush1.msra.mxu0 0.0
    %1013 = vmatprep.subr.mxu0 0.0
    %1014 = vmatpush1.msra.mxu0 0.0
    %1015 = vmatprep.subr.mxu0 0.0
    %1016 = vmatpush1.msra.mxu0 0.0
    %1017 = vmatprep.subr.mxu0 0.0
    %1018 = vmatpush1.msra.mxu0 0.0
    %1019 = vmatprep.subr.mxu0 0.0
    %1020 = vmatpush1.msra.mxu0 0.0
    %1021 = vmatprep.subr.mxu0 0.0
    %1022 = vmatpush1.msra.mxu0 0.0
    %1023 = vmatprep.subr.mxu0 0.0
    %1024 = vmatpush1.msra.mxu0 0.0
    %1025 = vmatprep.subr.mxu0 0.0
    %1026 = vmatpush1.msra.mxu0 0.0
    %1027 = vmatprep.subr.mxu0 0.0
    %1028 = vmatpush1.msra.mxu0 0.0
    %1029 = vmatprep.subr.mxu0 0.0
    %1030 = vmatpush1.msra.mxu0 0.0
    %1031 = vmatprep.subr.mxu0 0.0
    %1032 = vmatpush1.msra.mxu0 0.0
    %1033 = vmatprep.subr.mxu0 0.0
    %1034 = vmatpush1.msra.mxu0 0.0
    %1035 = vmatprep.subr.mxu0 0.0
    %1036 = vmatpush1.msra.mxu0 0.0
    %1037 = vmatprep.subr.mxu0 0.0
    %1038 = vmatpush1.msra.mxu0 0.0
    %1039 = vmatprep.subr.mxu0 0.0
    %1040 = vmatpush1.msra.mxu0 0.0
    %1041 = vmatprep.mubr.f32.mxu0 0.0
    %1042 = vmatmul.mubr.f32.gmra.mrb[0].mxu0 %v975
    %v1043 = vpop.f32.mrb[0].mxu0
    %v1044 = vadd.f32 %v970, %v1043
    %v1045 = vpop.f32.mrb[0].mxu0
    %1046 = vdwg.mxu0
    %vm1047 = vcmask 9216
    %1048 = vst.msk [vmem:[#allocation2] sm:$0x3] %vm1047, %v1044
    // Predicated region
    $region26: #{tpu_custom_call.1} parent=1 // pred_check
      _
    $region27: #{tpu_custom_call.1} parent=1 // pred_check_branch
      %1050 = sbr.rel (0) target = $region29
    $region28: #{tpu_custom_call.1} parent=1 // pred_region
      %s1052 = ssub.s32 32, 32
      %1053 = vsyncadd [#allocation3], %s1052
      %s1055 = sshll.u32 [#allocation2], 4
      %s1056 = int_to_ptr.vmem [resolvable:$true] %s1055
      %1058 = dma.vmem_to_hbm [thread:$0]  %s1056, 32, %s6, [#allocation3]
    $region29: #{tpu_custom_call.1} parent=1 // pred_fallthru
      _
    // Predicated region
    $region30: #{tpu_custom_call.1} parent=1 // pred_check
      _
    $region31: #{tpu_custom_call.1} parent=1 // pred_check_branch
      %1060 = sbr.rel (0) target = $region33
    $region32: #{tpu_custom_call.1} parent=1 // pred_region
      %1061 = dma.done [#allocation3], 32
    $region33: #{tpu_custom_call.1} parent=1 // pred_fallthru
      _
    %1062 = vsyncpa [#allocation3], 1

</llo_original>
